<compile_context>
chip_gen: v6e
topology: v6e:2x2x1
jax: 0.10.0
libtpu: 0.0.40
codegen_flags: <defaults>
</compile_context>

<pallas_src>
import jax
import jax.numpy as jnp
from jax.experimental import pallas as pl
from jax.experimental.pallas import tpu as pltpu

_NEG = -1e30
_LANE = 128
_SUBLANE = 8


def _round_up(x, m):
    return (x + m - 1) // m * m


def _kernel(x_ref, cw_ref, cb_ref, mask_ref, lw_ref, lb_ref, logits_ref):
    TB, Lp, KP = x_ref.shape
    NFP = cw_ref.shape[1]

    # Fused conv (all filter sizes) as one MXU matmul over the im2col tile,
    # flattened to 2-D (Lp % 8 == 0 => the merge is a pure layout no-op).
    x2 = x_ref[...].reshape(TB * Lp, KP)                                  # bf16
    conv = jnp.dot(x2, cw_ref[...],
                   preferred_element_type=jnp.float32)                    # (TB*Lp, NFP) f32, no bias
    conv = conv.reshape(TB, Lp, NFP) + mask_ref[...]                      # -1e30 where no valid window

    # Global max-pool over the sequence axis FIRST, then bias + tanh on the
    # pooled row only (hoist is exact: tanh monotone, bias constant per column).
    pooled = jnp.max(conv, axis=1)                                        # (TB, NFP)
    sent = jnp.tanh(pooled + cb_ref[...])                                 # (TB, NFP) f32

    # Final linear into the lane-dense padded logits slab.
    logits_ref[...] = jnp.dot(sent.astype(lw_ref.dtype), lw_ref[...],
                              preferred_element_type=jnp.float32) + lb_ref[...]


def _pick_tb(B, Lp, KP, NFP, CP, vmem_budget_bytes):
    """Pick a batch tile that keeps the double-buffered footprint inside budget."""
    weights = KP * NFP * 2 + NFP * 4 + Lp * NFP * 4 + NFP * CP * 2 + CP * 4
    per_row = (2 * Lp * KP * 2           # double-buffered bf16 im2col tile
               + 3 * Lp * NFP * 4        # ~3x f32 (Lp, NFP) intermediates Mosaic may materialize
               + NFP * 4                 # pooled row
               + 2 * CP * 4)             # double-buffered f32 logits slab
    tb = (vmem_budget_bytes - 2 * weights) // per_row
    tb = min(tb, 1024)                                    # hard cap (v7x: 64 MiB physical VMEM)
    tb = min(tb, _round_up(pl.cdiv(B, 8), _LANE))         # >= 8 grid steps for large B (megacore / overlap)
    if tb >= B:
        return B
    return max(_SUBLANE, (tb // _SUBLANE) * _SUBLANE)


def _default_vmem_budget_bytes():
    """64 MiB on v5e/v6e (128 MiB physical VMEM); conservative 32 MiB otherwise (v7x/unknown)."""
    try:
        kind = jax.devices()[0].device_kind.lower()
    except Exception:
        kind = ""
    if "v5" in kind or "v6" in kind:
        return 64 << 20
    return 32 << 20


def cnn_for_re_forward(input_ids, pos1_ids, pos2_ids, params, filters, seq_len,
                       *, compute_dtype=jnp.bfloat16, vmem_budget_bytes=None):
    filters = tuple(int(k) for k in filters)
    k_max = max(filters)
    assert k_max <= seq_len, "max(filters) must be <= seq_len (otherwise no valid conv window)"
    if vmem_budget_bytes is None:
        vmem_budget_bytes = _default_vmem_budget_bytes()

    # ---- glue (plain JAX): embedding lookups + feature concat ----
    word = jnp.take(params["word_emb"], input_ids, axis=0)
    p1 = jnp.take(params["pos1_emb"], pos1_ids, axis=0)
    p2 = jnp.take(params["pos2_emb"], pos2_ids, axis=0)
    feat = jnp.concatenate([word, p1, p2], axis=-1).astype(jnp.float32)   # (B, L, E)
    # nn.Dropout: identity at inference time.

    B, L, E = feat.shape
    assert L == seq_len, "sequence length must match args.seq_len"

    F = params[f"conv{filters[0]}_w"].shape[0]
    C = params["lin_b"].shape[-1]
    NF = len(filters) * F

    KP = _round_up(k_max * E, _LANE)
    NFP = _round_up(NF, _LANE)
    CP = _round_up(C, _LANE)
    Lp = _round_up(L, _SUBLANE)           # sublane-align L so in-kernel reshape is free

    # ---- host-side im2col: lane-dense (B, Lp, KP) slab (zero-padded tails) ----
    feat_pad = jnp.pad(feat, ((0, 0), (0, k_max - 1), (0, 0)))
    win = jnp.concatenate([feat_pad[:, j:j + L, :] for j in range(k_max)], axis=-1)
    if KP > k_max * E:
        win = jnp.pad(win, ((0, 0), (0, 0), (0, KP - k_max * E)))
    if Lp > L:
        win = jnp.pad(win, ((0, 0), (0, Lp - L), (0, 0)))
    win = win.astype(compute_dtype)

    # ---- fuse all conv weights/biases into one pre-padded matmul operand ----
    cw = jnp.zeros((KP, NFP), jnp.float32)
    cb = jnp.zeros((1, NFP), jnp.float32)
    mask = jnp.zeros((Lp, NFP), jnp.float32)
    pos = jnp.arange(Lp)
    for f, k in enumerate(filters):
        w = params[f"conv{k}_w"].astype(jnp.float32)             # (F, k*E), row-major over (k, E)
        b = params[f"conv{k}_b"].reshape(1, F).astype(jnp.float32)
        cw = cw.at[:k * E, f * F:(f + 1) * F].set(w.T)
        cb = cb.at[:, f * F:(f + 1) * F].set(b)
        invalid = (pos > (L - k))[:, None]                       # no valid k-window at these positions
        mask = mask.at[:, f * F:(f + 1) * F].set(jnp.where(invalid, _NEG, 0.0))
    if Lp > L:
        mask = mask.at[L:, :].set(_NEG)                          # padded sequence rows never win the pool
    cw = cw.astype(compute_dtype)

    # ---- padded final linear (logits = sent @ W.T + b) ----
    lw = jnp.zeros((NFP, CP), jnp.float32)
    lw = lw.at[:NF, :C].set(params["lin_w"].astype(jnp.float32).T)
    lb = jnp.zeros((1, CP), jnp.float32)
    lb = lb.at[:, :C].set(params["lin_b"].reshape(1, C).astype(jnp.float32))
    lw = lw.astype(compute_dtype)

    # ---- batch tiling ----
    TB = _pick_tb(B, Lp, KP, NFP, CP, vmem_budget_bytes)
    Bp = _round_up(B, TB)
    if Bp > B:
        win = jnp.pad(win, ((0, Bp - B), (0, 0), (0, 0)))
    grid = (Bp // TB,)

    vmem_limit = min(int(vmem_budget_bytes) + (16 << 20), 96 << 20)

    const2 = lambda b: (0, 0)
    cost = pl.CostEstimate(
        flops=2 * Bp * Lp * KP * NFP + 2 * Bp * NFP * CP,
        transcendentals=Bp * NFP,          # tanh hoisted past the pool: per pooled row, not per position
        bytes_accessed=(win.size * win.dtype.itemsize
                        + cw.size * 2 + lw.size * 2
                        + (cb.size + lb.size + mask.size) * 4
                        + Bp * CP * 4),
    )

    logits_pad = pl.pallas_call(
        _kernel,
        out_shape=jax.ShapeDtypeStruct((Bp, CP), jnp.float32),
        grid=grid,
        in_specs=[
            pl.BlockSpec((TB, Lp, KP), lambda b: (b, 0, 0)),
            pl.BlockSpec((KP, NFP), const2),
            pl.BlockSpec((1, NFP), const2),
            pl.BlockSpec((Lp, NFP), const2),
            pl.BlockSpec((NFP, CP), const2),
            pl.BlockSpec((1, CP), const2),
        ],
        out_specs=pl.BlockSpec((TB, CP), lambda b: (b, 0)),
        compiler_params=pltpu.CompilerParams(
            dimension_semantics=("parallel",),
            vmem_limit_bytes=vmem_limit,
        ),
        cost_estimate=cost,
    )(win, cw, cb, mask, lw, lb)

    logits = logits_pad[:B, :C]
    preds = jnp.argmax(logits, axis=-1)    # C = 5: trivial glue, avoids a 128-lane padded output slab
    return logits, preds


def _reference(input_ids, pos1_ids, pos2_ids, params, filters, seq_len):
    """Pure-JAX f32 reference of the PyTorch forward (inference path)."""
    word = jnp.take(params["word_emb"], input_ids, axis=0)
    p1 = jnp.take(params["pos1_emb"], pos1_ids, axis=0)
    p2 = jnp.take(params["pos2_emb"], pos2_ids, axis=0)
    feat = jnp.concatenate([word, p1, p2], axis=-1)
    B, L, E = feat.shape
    pooled = []
    for k in filters:
        w = params[f"conv{k}_w"].reshape(-1, k, E)
        b = params[f"conv{k}_b"].reshape(-1)
        outs = [jnp.einsum("bke,fke->bf", feat[:, t:t + k, :], w) + b for t in range(L - k + 1)]
        conv = jnp.stack(outs, axis=-1)                       # (B, F, L-k+1)
        pooled.append(jnp.max(jnp.tanh(conv), axis=-1))       # (B, F)
    sent = jnp.concatenate(pooled, axis=-1)
    logits = sent @ params["lin_w"].T + params["lin_b"].reshape(-1)
    return logits, jnp.argmax(logits, axis=-1)


if __name__ == "__main__":
    # Small config consistent with the module's __init__ / forward.
    vocab = 32
    word_dim = 24
    pos_dim = 4
    seq_len = 8
    filters = (2, 3, 4)
    filter_num = 8
    num_labels = 5
    batch = 2
    emb_dim = word_dim + 2 * pos_dim          # 32 -> k_max*E = 128 exactly

    key = jax.random.PRNGKey(0)
    keys = jax.random.split(key, 14)

    # Embedding tables (deterministic init, padding rows zeroed like padding_idx).
    word_emb = jax.random.normal(keys[0], (vocab, word_dim), jnp.float32) * 0.1
    word_emb = word_emb.at[vocab - 1].set(0.0)                 # pad_id = vocab - 1
    pos1_emb = jax.random.normal(keys[1], (2 * seq_len, pos_dim), jnp.float32) * 0.1
    pos1_emb = pos1_emb.at[2 * seq_len - 1].set(0.0)
    pos2_emb = jax.random.normal(keys[2], (2 * seq_len, pos_dim), jnp.float32) * 0.1
    pos2_emb = pos2_emb.at[2 * seq_len - 1].set(0.0)

    params = {"word_emb": word_emb, "pos1_emb": pos1_emb, "pos2_emb": pos2_emb}

    # Conv2d(1, filter_num, kernel_size=(k, emb_dim)) weights: (F, 1, k, E) -> (F, k*E).
    for i, k in enumerate(filters):
        params[f"conv{k}_w"] = (
            jax.random.normal(keys[3 + i], (filter_num, k * emb_dim), jnp.float32) * 0.05)
        params[f"conv{k}_b"] = (
            jax.random.normal(keys[6 + i], (1, filter_num), jnp.float32) * 0.05)

    filter_dim = filter_num * len(filters)
    params["lin_w"] = jax.random.normal(keys[9], (num_labels, filter_dim), jnp.float32) * 0.05
    params["lin_b"] = jax.random.normal(keys[10], (1, num_labels), jnp.float32) * 0.05

    # Inputs: token ids and relative-position ids.
    input_ids = jax.random.randint(keys[11], (batch, seq_len), 0, vocab)
    pos1_ids = jax.random.randint(keys[12], (batch, seq_len), 0, 2 * seq_len)
    pos2_ids = jax.random.randint(keys[13], (batch, seq_len), 0, 2 * seq_len)

    logits, preds = cnn_for_re_forward(input_ids, pos1_ids, pos2_ids, params, filters, seq_len)
    jax.block_until_ready((logits, preds))

    ref_logits, _ = _reference(input_ids, pos1_ids, pos2_ids, params, filters, seq_len)
    assert logits.shape == (batch, num_labels) and preds.shape == (batch,)
    assert bool(jnp.allclose(logits, ref_logits, atol=5e-2, rtol=5e-2)), "logits mismatch vs reference"
    print("KERNEL_OK")
</pallas_src>

<mosaic_0001>
module attributes {stable_mosaic.version = 11 : i64} {
  func.func @_kernel(%arg0: i32, %arg1: memref<2x8x128xbf16, #tpu.memory_space<vmem>>, %arg2: memref<128x128xbf16, #tpu.memory_space<vmem>>, %arg3: memref<1x128xf32, #tpu.memory_space<vmem>>, %arg4: memref<8x128xf32, #tpu.memory_space<vmem>>, %arg5: memref<128x128xbf16, #tpu.memory_space<vmem>>, %arg6: memref<1x128xf32, #tpu.memory_space<vmem>>, %arg7: memref<2x128xf32, #tpu.memory_space<vmem>>) attributes {dimension_semantics = [#tpu.dimension_semantics<parallel>], iteration_bounds = array<i64: 1>, scalar_prefetch = 0 : i64, scratch_operands = 0 : i64, tpu.core_type = #tpu.core_type<tc>, window_params = [{transform_indices = @transform_0, window_bounds = array<i64: 2, 8, 128>}, {pipeline_mode = #tpu.pipeline_mode<synchronous>, transform_indices = @transform_1, window_bounds = array<i64: 128, 128>}, {pipeline_mode = #tpu.pipeline_mode<synchronous>, transform_indices = @transform_2, window_bounds = array<i64: 1, 128>}, {pipeline_mode = #tpu.pipeline_mode<synchronous>, transform_indices = @transform_3, window_bounds = array<i64: 8, 128>}, {pipeline_mode = #tpu.pipeline_mode<synchronous>, transform_indices = @transform_4, window_bounds = array<i64: 128, 128>}, {pipeline_mode = #tpu.pipeline_mode<synchronous>, transform_indices = @transform_5, window_bounds = array<i64: 1, 128>}, {transform_indices = @transform_6, window_bounds = array<i64: 2, 128>}]} {
    %c0 = arith.constant 0 : index
    %c0_0 = arith.constant 0 : index
    %c0_1 = arith.constant 0 : index
    %0 = vector.load %arg1[%c0, %c0_0, %c0_1] : memref<2x8x128xbf16, #tpu.memory_space<vmem>>, vector<2x8x128xbf16>
    %1 = vector.shape_cast %0 : vector<2x8x128xbf16> to vector<16x128xbf16>
    %c0_2 = arith.constant 0 : index
    %c0_3 = arith.constant 0 : index
    %2 = vector.load %arg2[%c0_2, %c0_3] : memref<128x128xbf16, #tpu.memory_space<vmem>>, vector<128x128xbf16>
    %cst = arith.constant dense<0.000000e+00> : vector<16x128xf32>
    %3 = tpu.matmul %1, %2, %cst {dimension_numbers = #tpu.dot_dimension_numbers<[1], [0], [0], [1], [0, 0, 1, 1], [], []>} : vector<16x128xbf16>, vector<128x128xbf16>, vector<16x128xf32> -> vector<16x128xf32>
    %4 = vector.shape_cast %3 : vector<16x128xf32> to vector<2x8x128xf32>
    %c0_4 = arith.constant 0 : index
    %c0_5 = arith.constant 0 : index
    %5 = vector.load %arg4[%c0_4, %c0_5] : memref<8x128xf32, #tpu.memory_space<vmem>>, vector<8x128xf32>
    %6 = vector.shape_cast %5 : vector<8x128xf32> to vector<1x8x128xf32>
    %7 = vector.broadcast %6 : vector<1x8x128xf32> to vector<2x8x128xf32>
    %8 = arith.addf %4, %7 : vector<2x8x128xf32>
    %cst_6 = arith.constant dense<0xFF800000> : vector<2x128xf32>
    %9 = vector.multi_reduction <maximumf>, %8, %cst_6 [1] : vector<2x8x128xf32> to vector<2x128xf32>
    %c0_7 = arith.constant 0 : index
    %c0_8 = arith.constant 0 : index
    %10 = vector.load %arg3[%c0_7, %c0_8] : memref<1x128xf32, #tpu.memory_space<vmem>>, vector<1x128xf32>
    %11 = vector.broadcast %10 : vector<1x128xf32> to vector<2x128xf32>
    %12 = arith.addf %9, %11 : vector<2x128xf32>
    %13 = math.tanh %12 : vector<2x128xf32>
    %14 = arith.truncf %13 : vector<2x128xf32> to vector<2x128xbf16>
    %c0_9 = arith.constant 0 : index
    %c0_10 = arith.constant 0 : index
    %15 = vector.load %arg5[%c0_9, %c0_10] : memref<128x128xbf16, #tpu.memory_space<vmem>>, vector<128x128xbf16>
    %cst_11 = arith.constant dense<0.000000e+00> : vector<2x128xf32>
    %16 = tpu.matmul %14, %15, %cst_11 {dimension_numbers = #tpu.dot_dimension_numbers<[1], [0], [0], [1], [0, 0, 1, 1], [], []>} : vector<2x128xbf16>, vector<128x128xbf16>, vector<2x128xf32> -> vector<2x128xf32>
    %c0_12 = arith.constant 0 : index
    %c0_13 = arith.constant 0 : index
    %17 = vector.load %arg6[%c0_12, %c0_13] : memref<1x128xf32, #tpu.memory_space<vmem>>, vector<1x128xf32>
    %18 = vector.broadcast %17 : vector<1x128xf32> to vector<2x128xf32>
    %19 = arith.addf %16, %18 : vector<2x128xf32>
    %c0_14 = arith.constant 0 : index
    %c0_15 = arith.constant 0 : index
    %20 = vector.load %arg7[%c0_14, %c0_15] : memref<2x128xf32, #tpu.memory_space<vmem>>, vector<2x128xf32>
    tpu.vector_store %arg7[%c0_14, %c0_15], %19 {strides = array<i32>} : memref<2x128xf32, #tpu.memory_space<vmem>>, vector<2x128xf32>,
    return
  }
  func.func @transform_0(%arg0: i32) -> (i32, i32, i32) {
    %c0_i32 = arith.constant 0 : i32
    %c0_i32_0 = arith.constant 0 : i32
    %c0_i32_1 = arith.constant 0 : i32
    return %arg0, %c0_i32, %c0_i32_0 : i32, i32, i32
  }
  func.func @transform_1(%arg0: i32) -> (i32, i32) {
    %c0_i32 = arith.constant 0 : i32
    %c0_i32_0 = arith.constant 0 : i32
    %c0_i32_1 = arith.constant 0 : i32
    return %c0_i32, %c0_i32_0 : i32, i32
  }
  func.func @transform_2(%arg0: i32) -> (i32, i32) {
    %c0_i32 = arith.constant 0 : i32
    %c0_i32_0 = arith.constant 0 : i32
    %c0_i32_1 = arith.constant 0 : i32
    return %c0_i32, %c0_i32_0 : i32, i32
  }
  func.func @transform_3(%arg0: i32) -> (i32, i32) {
    %c0_i32 = arith.constant 0 : i32
    %c0_i32_0 = arith.constant 0 : i32
    %c0_i32_1 = arith.constant 0 : i32
    return %c0_i32, %c0_i32_0 : i32, i32
  }
  func.func @transform_4(%arg0: i32) -> (i32, i32) {
    %c0_i32 = arith.constant 0 : i32
    %c0_i32_0 = arith.constant 0 : i32
    %c0_i32_1 = arith.constant 0 : i32
    return %c0_i32, %c0_i32_0 : i32, i32
  }
  func.func @transform_5(%arg0: i32) -> (i32, i32) {
    %c0_i32 = arith.constant 0 : i32
    %c0_i32_0 = arith.constant 0 : i32
    %c0_i32_1 = arith.constant 0 : i32
    return %c0_i32, %c0_i32_0 : i32, i32
  }
  func.func @transform_6(%arg0: i32) -> (i32, i32) {
    %c0_i32 = arith.constant 0 : i32
    %c0_i32_0 = arith.constant 0 : i32
    return %arg0, %c0_i32 : i32, i32
  }
}

</mosaic_0001>

<llo_original>
// kernel: tpu_custom_call.1
$region0: #{tpu_custom_call.1}
  #allocation0 [shape = 'u32[]', space=smem, size = 0x4, offset = 0x4, fixed_abs, tag = 'smem constant byte address 0x4 - core index']
  #allocation1 [shape = 'u32[144,128]{1,0:T(1,128)}', space=vmem, size = 0x12000, scoped, tag = 'internal scratch']
  %s0 = inlined_call_operand.hbm [shape: bf16[2,8,128], index: 0, kind: input, shape index: {}]
  %s1 = inlined_call_operand.hbm [shape: bf16[128,128], index: 1, kind: input, shape index: {}]
  %s2 = inlined_call_operand.vmem [shape: f32[1,128], index: 2, kind: input, shape index: {}]
  %s3 = inlined_call_operand.hbm [shape: f32[8,128], index: 3, kind: input, shape index: {}]
  %s4 = inlined_call_operand.hbm [shape: bf16[128,128], index: 4, kind: input, shape index: {}]
  %s5 = inlined_call_operand.vmem [shape: f32[1,128], index: 5, kind: input, shape index: {}]
  %s6 = inlined_call_operand.hbm [shape: f32[2,128], index: 6, kind: output, shape index: {}]
  %s7 = sld [smem:[#allocation0]]
  $region50: #{tpu_custom_call.1} parent=0
    _
  %s9 = ssub.s32 1, %s7
  %s10 = scalar_select 0, %s9, %s7
  $region1: #{tpu_custom_call.1} parent=0
    #allocation2 [shape = 'u8[4096]{0}', space=vmem, size = 0x1000, scoped, tag = 'input window, operand 0, single buffered']
    #allocation3 [shape = 's32[1]{0}', space=sflag, size = 0x4, scoped, tag = 'scoped memory for tpu_custom_call.1']
    #allocation4 [shape = 's32[1]{0}', space=sflag, size = 0x4, scoped, tag = 'scoped memory for tpu_custom_call.1']
    #allocation5 [shape = 'u8[32768]{0}', space=vmem, size = 0x8000, scoped, tag = 'input window, operand 1, single buffered']
    #allocation6 [shape = 's32[1]{0}', space=sflag, size = 0x4, scoped, tag = 'scoped memory for tpu_custom_call.1']
    #allocation7 [shape = 'u8[4096]{0}', space=vmem, size = 0x1000, scoped, tag = 'input window, operand 3, single buffered']
    #allocation8 [shape = 'u8[32768]{0}', space=vmem, size = 0x8000, scoped, tag = 'input window, operand 4, single buffered']
    #allocation9 [shape = 's32[1]{0}', space=sflag, size = 0x4, scoped, tag = 'scoped memory for tpu_custom_call.1']
    #allocation10 [shape = 'u8[1024]{0}', space=vmem, size = 0x400, scoped, tag = 'output window, operand 0, single buffered']
    %11 = vsyncpa [#allocation3], 0
    %12 = vsyncpa [#allocation6], 0
    %13 = vsyncpa [#allocation9], 0
    %14 = vsyncpa [#allocation4], 0
    // Predicated region
    $region2: #{tpu_custom_call.1} parent=1 // pred_check
      _
    $region3: #{tpu_custom_call.1} parent=1 // pred_check_branch
      %16 = sbr.rel (0) target = $region5
    $region4: #{tpu_custom_call.1} parent=1 // pred_region
      %s18 = ssub.s32 128, 128
      %19 = vsyncadd [#allocation3], %s18
      %s20 = sshll.u32 [#allocation2], 4
      %s21 = int_to_ptr.vmem [resolvable:$true] %s20
      %26 = dma.hbm_to_vmem [thread:$0]  %s0, 128, %s21, [#allocation3], 64, 64, 4
    $region5: #{tpu_custom_call.1} parent=1 // pred_fallthru
      _
    // Predicated region
    $region6: #{tpu_custom_call.1} parent=1 // pred_check
      _
    $region7: #{tpu_custom_call.1} parent=1 // pred_check_branch
      %28 = sbr.rel (0) target = $region9
    $region8: #{tpu_custom_call.1} parent=1 // pred_region
      %s30 = ssub.s32 1024, 1024
      %31 = vsyncadd [#allocation6], %s30
      %s32 = sshll.u32 [#allocation5], 4
      %s33 = int_to_ptr.vmem [resolvable:$true] %s32
      %38 = dma.hbm_to_vmem [thread:$0]  %s1, 1024, %s33, [#allocation6], 64, 64, 4
    $region9: #{tpu_custom_call.1} parent=1 // pred_fallthru
      _
    // Predicated region
    $region10: #{tpu_custom_call.1} parent=1 // pred_check
      _
    $region11: #{tpu_custom_call.1} parent=1 // pred_check_branch
      %40 = sbr.rel (0) target = $region13
    $region12: #{tpu_custom_call.1} parent=1 // pred_region
      _
    $region13: #{tpu_custom_call.1} parent=1 // pred_fallthru
      _
    // Predicated region
    $region14: #{tpu_custom_call.1} parent=1 // pred_check
      _
    $region15: #{tpu_custom_call.1} parent=1 // pred_check_branch
      %42 = sbr.rel (0) target = $region17
    $region16: #{tpu_custom_call.1} parent=1 // pred_region
      %s44 = ssub.s32 128, 128
      %45 = vsyncadd [#allocation6], %s44
      %s47 = sshll.u32 [#allocation7], 4
      %s48 = int_to_ptr.vmem [resolvable:$true] %s47
      %50 = dma.hbm_to_vmem [thread:$0]  %s3, 128, %s48, [#allocation6]
    $region17: #{tpu_custom_call.1} parent=1 // pred_fallthru
      _
    // Predicated region
    $region18: #{tpu_custom_call.1} parent=1 // pred_check
      _
    $region19: #{tpu_custom_call.1} parent=1 // pred_check_branch
      %52 = sbr.rel (0) target = $region21
    $region20: #{tpu_custom_call.1} parent=1 // pred_region
      %s54 = ssub.s32 1024, 1024
      %55 = vsyncadd [#allocation9], %s54
      %s56 = sshll.u32 [#allocation8], 4
      %s57 = int_to_ptr.vmem [resolvable:$true] %s56
      %62 = dma.hbm_to_vmem [thread:$0]  %s4, 1024, %s57, [#allocation9], 64, 64, 4
    $region21: #{tpu_custom_call.1} parent=1 // pred_fallthru
      _
    // Predicated region
    $region22: #{tpu_custom_call.1} parent=1 // pred_check
      _
    $region23: #{tpu_custom_call.1} parent=1 // pred_check_branch
      %64 = sbr.rel (0) target = $region25
    $region24: #{tpu_custom_call.1} parent=1 // pred_region
      _
    $region25: #{tpu_custom_call.1} parent=1 // pred_fallthru
      _
    // Predicated region
    $region26: #{tpu_custom_call.1} parent=1 // pred_check
      _
    $region27: #{tpu_custom_call.1} parent=1 // pred_check_branch
      %66 = sbr.rel (0) target = $region29
    $region28: #{tpu_custom_call.1} parent=1 // pred_region
      %67 = dma.done [#allocation3], 128
    $region29: #{tpu_custom_call.1} parent=1 // pred_fallthru
      _
    // Predicated region
    $region30: #{tpu_custom_call.1} parent=1 // pred_check
      _
    $region31: #{tpu_custom_call.1} parent=1 // pred_check_branch
      %69 = sbr.rel (0) target = $region33
    $region32: #{tpu_custom_call.1} parent=1 // pred_region
      %70 = dma.done [#allocation6], 1024
    $region33: #{tpu_custom_call.1} parent=1 // pred_fallthru
      _
    // Predicated region
    $region34: #{tpu_custom_call.1} parent=1 // pred_check
      _
    $region35: #{tpu_custom_call.1} parent=1 // pred_check_branch
      %72 = sbr.rel (0) target = $region37
    $region36: #{tpu_custom_call.1} parent=1 // pred_region
      %73 = dma.done [#allocation6], 128
    $region37: #{tpu_custom_call.1} parent=1 // pred_fallthru
      _
    // Predicated region
    $region38: #{tpu_custom_call.1} parent=1 // pred_check
      _
    $region39: #{tpu_custom_call.1} parent=1 // pred_check_branch
      %75 = sbr.rel (0) target = $region41
    $region40: #{tpu_custom_call.1} parent=1 // pred_region
      %76 = dma.done [#allocation9], 1024
    $region41: #{tpu_custom_call.1} parent=1 // pred_fallthru
      _
    %v78 = vld [vmem:[#allocation2] sm:$0xf]
    %v79 = vld [vmem:[#allocation2 + $0x4] sm:$0xf]
    %v80 = vld [vmem:[#allocation5] sm:$0xf]
    %v81 = vld [vmem:[#allocation5 + $0x4] sm:$0xf]
    %v82 = vld [vmem:[#allocation5 + $0x8] sm:$0xf]
    %v83 = vld [vmem:[#allocation5 + $0xc] sm:$0xf]
    %v84 = vld [vmem:[#allocation5 + $0x10] sm:$0xf]
    %v85 = vld [vmem:[#allocation5 + $0x14] sm:$0xf]
    %v86 = vld [vmem:[#allocation5 + $0x18] sm:$0xf]
    %v87 = vld [vmem:[#allocation5 + $0x1c] sm:$0xf]
    %v88 = vld [vmem:[#allocation5 + $0x20] sm:$0xf]
    %v89 = vld [vmem:[#allocation5 + $0x24] sm:$0xf]
    %v90 = vld [vmem:[#allocation5 + $0x28] sm:$0xf]
    %v91 = vld [vmem:[#allocation5 + $0x2c] sm:$0xf]
    %v92 = vld [vmem:[#allocation5 + $0x30] sm:$0xf]
    %v93 = vld [vmem:[#allocation5 + $0x34] sm:$0xf]
    %v94 = vld [vmem:[#allocation5 + $0x38] sm:$0xf]
    %v95 = vld [vmem:[#allocation5 + $0x3c] sm:$0xf]
    %v98 = vunpack.c.l.b16 %v78
    %v99 = vunpack.c.l.b16 %v79
    %v100 = vpack.c.b16 %v99, %v98
    %v118 = vunpack.c.l.b16 %v80
    %v119 = vunpack.c.l.b16 %v81
    %v120 = vunpack.c.l.b16 %v82
    %v121 = vunpack.c.l.b16 %v83
    %v122 = vunpack.c.l.b16 %v84
    %v123 = vunpack.c.l.b16 %v85
    %v124 = vunpack.c.l.b16 %v86
    %v125 = vunpack.c.l.b16 %v87
    %v126 = vunpack.c.l.b16 %v88
    %v127 = vunpack.c.l.b16 %v89
    %v128 = vunpack.c.l.b16 %v90
    %v129 = vunpack.c.l.b16 %v91
    %v130 = vunpack.c.l.b16 %v92
    %v131 = vunpack.c.l.b16 %v93
    %v132 = vunpack.c.l.b16 %v94
    %v133 = vunpack.c.l.b16 %v95
    %v134 = vpack.c.b16 %v119, %v118
    %v135 = vpack.c.b16 %v121, %v120
    %v136 = vpack.c.b16 %v123, %v122
    %v137 = vpack.c.b16 %v125, %v124
    %v138 = vpack.c.b16 %v127, %v126
    %v139 = vpack.c.b16 %v129, %v128
    %v140 = vpack.c.b16 %v131, %v130
    %v141 = vpack.c.b16 %v133, %v132
    %150 = vmatprep.subr.bf16.mxu0 0
    %151 = vmatpush1.bf16.msra.mxu0 %v141
    %152 = vmatprep.subr.bf16.mxu0 0
    %153 = vmatpush1.bf16.msra.mxu0 %v140
    %154 = vmatprep.subr.bf16.mxu0 0
    %155 = vmatpush1.bf16.msra.mxu0 %v139
    %156 = vmatprep.subr.bf16.mxu0 0
    %157 = vmatpush1.bf16.msra.mxu0 %v138
    %158 = vmatprep.subr.bf16.mxu0 0
    %159 = vmatpush1.bf16.msra.mxu0 %v137
    %160 = vmatprep.subr.bf16.mxu0 0
    %161 = vmatpush1.bf16.msra.mxu0 %v136
    %162 = vmatprep.subr.bf16.mxu0 0
    %163 = vmatpush1.bf16.msra.mxu0 %v135
    %164 = vmatprep.subr.bf16.mxu0 0
    %165 = vmatpush1.bf16.msra.mxu0 %v134
    %166 = vmatprep.subr.bf16.mxu0 0
    %167 = vmatpush2.bf16.msra.mxu0 0
    %168 = vmatprep.subr.bf16.mxu0 0
    %169 = vmatpush2.bf16.msra.mxu0 0
    %170 = vmatprep.subr.bf16.mxu0 0
    %171 = vmatpush2.bf16.msra.mxu0 0
    %172 = vmatprep.subr.bf16.mxu0 0
    %173 = vmatpush2.bf16.msra.mxu0 0
    %174 = vmatprep.subr.bf16.mxu0 0
    %175 = vmatpush2.bf16.msra.mxu0 0
    %176 = vmatprep.subr.bf16.mxu0 0
    %177 = vmatpush2.bf16.msra.mxu0 0
    %178 = vmatprep.subr.bf16.mxu0 0
    %179 = vmatpush2.bf16.msra.mxu0 0
    %180 = vmatprep.subr.bf16.mxu0 0
    %181 = vmatpush2.bf16.msra.mxu0 0
    %182 = vmatprep.mubr.bf16.mxu0 0
    %183 = vmatmul.mubr.bf16.gmra.mxu0 %v100
    %v184 = vpop.f32.mrf.mxu0
    %v185 = vadd.f32 0.0, %v184
    %v186 = vpop.f32.mrf.mxu0
    %v187 = vpop.f32.mrf.mxu0
    %v188 = vadd.f32 0.0, %v187
    %v189 = vpop.f32.mrf.mxu0
    %190 = vdwg.mxu0
    %v191 = vld [vmem:[#allocation7] sm:$0xff]
    %v192 = vadd.f32 %v185, %v191
    %v193 = vadd.f32 %v188, %v191
    %v194 = vrot.slane %v192, 4
    %v195 = vmax.f32 %v192, %v194
    %v196 = vrot.slane %v195, 2
    %v197 = vmax.f32 %v195, %v196
    %v198 = vrot.slane %v197, 1
    %v199 = vmax.f32 %v197, %v198
    %v200 = vrot.slane %v193, 4
    %v201 = vmax.f32 %v193, %v200
    %v202 = vrot.slane %v201, 2
    %v203 = vmax.f32 %v201, %v202
    %v204 = vrot.slane %v203, 1
    %v205 = vmax.f32 %v203, %v204
    %v206 = vld [vmem:[%s2] sm:$0x1]
    %v208 = vlaneseq
    %v209 = vshrl.u32 %v208, 7
    %v210 = vsub.s32 0, %v209
    %v211 = vrot.slane %v206, %v210
    %v213 = vadd.f32 %v199, %v211
    %v214 = vadd.f32 %v205, %v211
    %v215 = vtanh.pop %v213
    %v216 = vtanh.pop %v214
    %v217 = vpack.c.bf16 %v215, %v215
    %v218 = vpack.c.bf16 %v216, %v216
    %v219 = vld [vmem:[#allocation8] sm:$0xf]
    %v220 = vld [vmem:[#allocation8 + $0x4] sm:$0xf]
    %v221 = vld [vmem:[#allocation8 + $0x8] sm:$0xf]
    %v222 = vld [vmem:[#allocation8 + $0xc] sm:$0xf]
    %v223 = vld [vmem:[#allocation8 + $0x10] sm:$0xf]
    %v224 = vld [vmem:[#allocation8 + $0x14] sm:$0xf]
    %v225 = vld [vmem:[#allocation8 + $0x18] sm:$0xf]
    %v226 = vld [vmem:[#allocation8 + $0x1c] sm:$0xf]
    %v227 = vld [vmem:[#allocation8 + $0x20] sm:$0xf]
    %v228 = vld [vmem:[#allocation8 + $0x24] sm:$0xf]
    %v229 = vld [vmem:[#allocation8 + $0x28] sm:$0xf]
    %v230 = vld [vmem:[#allocation8 + $0x2c] sm:$0xf]
    %v231 = vld [vmem:[#allocation8 + $0x30] sm:$0xf]
    %v232 = vld [vmem:[#allocation8 + $0x34] sm:$0xf]
    %v233 = vld [vmem:[#allocation8 + $0x38] sm:$0xf]
    %v234 = vld [vmem:[#allocation8 + $0x3c] sm:$0xf]
    %v235 = vld [vmem:[%s5] sm:$0x1]
    %v237 = vlaneseq
    %v238 = vshrl.u32 %v237, 7
    %v239 = vsub.s32 0, %v238
    %v240 = vrot.slane %v235, %v239
    %v244 = vunpack.c.l.b16 %v217
    %v245 = vunpack.c.l.b16 %v218
    %v246 = vrot.slane %v245, 7
    %vm247 = vcmask 1041409
    %v248 = vsel %vm247, %v246, %v244
    %v249 = vpack.c.b16 %v248, %v248
    %v267 = vunpack.c.l.b16 %v219
    %v268 = vunpack.c.l.b16 %v220
    %v269 = vunpack.c.l.b16 %v221
    %v270 = vunpack.c.l.b16 %v222
    %v271 = vunpack.c.l.b16 %v223
    %v272 = vunpack.c.l.b16 %v224
    %v273 = vunpack.c.l.b16 %v225
    %v274 = vunpack.c.l.b16 %v226
    %v275 = vunpack.c.l.b16 %v227
    %v276 = vunpack.c.l.b16 %v228
    %v277 = vunpack.c.l.b16 %v229
    %v278 = vunpack.c.l.b16 %v230
    %v279 = vunpack.c.l.b16 %v231
    %v280 = vunpack.c.l.b16 %v232
    %v281 = vunpack.c.l.b16 %v233
    %v282 = vunpack.c.l.b16 %v234
    %v283 = vpack.c.b16 %v268, %v267
    %v284 = vpack.c.b16 %v270, %v269
    %v285 = vpack.c.b16 %v272, %v271
    %v286 = vpack.c.b16 %v274, %v273
    %v287 = vpack.c.b16 %v276, %v275
    %v288 = vpack.c.b16 %v278, %v277
    %v289 = vpack.c.b16 %v280, %v279
    %v290 = vpack.c.b16 %v282, %v281
    %299 = vmatprep.subr.bf16.mxu0 0
    %300 = vmatpush1.bf16.msra.mxu0 %v290
    %301 = vmatprep.subr.bf16.mxu0 0
    %302 = vmatpush1.bf16.msra.mxu0 %v289
    %303 = vmatprep.subr.bf16.mxu0 0
    %304 = vmatpush1.bf16.msra.mxu0 %v288
    %305 = vmatprep.subr.bf16.mxu0 0
    %306 = vmatpush1.bf16.msra.mxu0 %v287
    %307 = vmatprep.subr.bf16.mxu0 0
    %308 = vmatpush1.bf16.msra.mxu0 %v286
    %309 = vmatprep.subr.bf16.mxu0 0
    %310 = vmatpush1.bf16.msra.mxu0 %v285
    %311 = vmatprep.subr.bf16.mxu0 0
    %312 = vmatpush1.bf16.msra.mxu0 %v284
    %313 = vmatprep.subr.bf16.mxu0 0
    %314 = vmatpush1.bf16.msra.mxu0 %v283
    %315 = vmatprep.subr.bf16.mxu0 0
    %316 = vmatpush2.bf16.msra.mxu0 0
    %317 = vmatprep.subr.bf16.mxu0 0
    %318 = vmatpush2.bf16.msra.mxu0 0
    %319 = vmatprep.subr.bf16.mxu0 0
    %320 = vmatpush2.bf16.msra.mxu0 0
    %321 = vmatprep.subr.bf16.mxu0 0
    %322 = vmatpush2.bf16.msra.mxu0 0
    %323 = vmatprep.subr.bf16.mxu0 0
    %324 = vmatpush2.bf16.msra.mxu0 0
    %325 = vmatprep.subr.bf16.mxu0 0
    %326 = vmatpush2.bf16.msra.mxu0 0
    %327 = vmatprep.subr.bf16.mxu0 0
    %328 = vmatpush2.bf16.msra.mxu0 0
    %329 = vmatprep.subr.bf16.mxu0 0
    %330 = vmatpush2.bf16.msra.mxu0 0
    %331 = vmatprep.mubr.bf16.mxu0 0
    %332 = vmatmul.mubr.bf16.gmra.mxu0 %v249
    %v333 = vpop.f32.mrf.mxu0
    %v334 = vadd.f32 %v240, %v333
    %v335 = vpop.f32.mrf.mxu0
    %v336 = vpop.f32.mrf.mxu0
    %v337 = vpop.f32.mrf.mxu0
    %338 = vdwg.mxu0
    %339 = vst [vmem:[#allocation10] sm:$0x3] %v334
    // Predicated region
    $region42: #{tpu_custom_call.1} parent=1 // pred_check
      _
    $region43: #{tpu_custom_call.1} parent=1 // pred_check_branch
      %341 = sbr.rel (0) target = $region45
    $region44: #{tpu_custom_call.1} parent=1 // pred_region
      %s343 = ssub.s32 32, 32
      %344 = vsyncadd [#allocation4], %s343
      %s346 = sshll.u32 [#allocation10], 4
      %s347 = int_to_ptr.vmem [resolvable:$true] %s346
      %349 = dma.vmem_to_hbm [thread:$0]  %s347, 32, %s6, [#allocation4]
    $region45: #{tpu_custom_call.1} parent=1 // pred_fallthru
      _
    // Predicated region
    $region46: #{tpu_custom_call.1} parent=1 // pred_check
      _
    $region47: #{tpu_custom_call.1} parent=1 // pred_check_branch
      %351 = sbr.rel (0) target = $region49
    $region48: #{tpu_custom_call.1} parent=1 // pred_region
      %352 = dma.done [#allocation4], 32
    $region49: #{tpu_custom_call.1} parent=1 // pred_fallthru
      _
    %353 = vsyncpa [#allocation3], 1
    %354 = vsyncpa [#allocation6], 1
    %355 = vsyncpa [#allocation9], 1
    %356 = vsyncpa [#allocation4], 1

</llo_original>
